<compile_context>
chip_gen: v7x
topology: tpu7x:2x2x1
jax: 0.10.0
libtpu: 0.0.40
codegen_flags: <defaults>
</compile_context>

<pallas_src>
import functools

import jax
import jax.numpy as jnp
from jax import lax
from jax.experimental import pallas as pl
from jax.experimental.pallas import tpu as pltpu


# ---------------------------------------------------------------------------
# Parameter / buffer construction (plain JAX glue)
# ---------------------------------------------------------------------------
def make_positional_encoding(max_len: int, embed_size: int) -> jnp.ndarray:
    """Sinusoidal positional encoding, identical math to PositionalEmbedding."""
    # TODO(synk): assumes even embed_size (same as the PyTorch module's interleave).
    pos = jnp.arange(max_len, dtype=jnp.float32)[:, None]        # (L, 1)
    _2i = jnp.arange(0, embed_size, 2, dtype=jnp.float32)        # (E/2,)
    div = jnp.power(10000.0, _2i / float(embed_size))            # (E/2,)
    enc = jnp.zeros((max_len, embed_size), dtype=jnp.float32)
    enc = enc.at[:, 0::2].set(jnp.sin(pos / div))
    enc = enc.at[:, 1::2].set(jnp.cos(pos / div))
    return enc


def make_token_embedding_table(key, vocab_size: int, embed_size: int) -> jnp.ndarray:
    """nn.Embedding(vocab_size, embed_size, padding_idx=1): N(0,1) init, row 1 zeroed."""
    table = jax.random.normal(key, (vocab_size, embed_size), dtype=jnp.float32)
    table = table.at[1, :].set(0.0)   # padding_idx = 1
    return table


# ---------------------------------------------------------------------------
# Pallas kernel: one (batch element, seq tile) per grid step
# ---------------------------------------------------------------------------
def _embedding_kernel(seed_ref, ids_ref, table_ref, pos_ref, out_ref,
                      rows_vmem, copy_sems, *, drop_prob, seq_len):
    # seed_ref : (1,)       int32  SMEM  (scalar prefetch)
    # ids_ref  : (B, S)     int32  SMEM  (scalar prefetch)
    # table_ref: (V, E)     f32    HBM   (memory_space=pl.ANY, no auto-DMA)
    # pos_ref  : (tS, E)    f32    VMEM  (positional encoding for this seq tile)
    # out_ref  : (1, tS, E) f32    VMEM
    # rows_vmem: (tS, E)    f32    VMEM scratch (gather landing buffer)
    # copy_sems: (tS,)      DMA semaphores
    b = pl.program_id(0)
    st = pl.program_id(1)
    tS, E = rows_vmem.shape
    V = table_ref.shape[0]

    # --- DMA row-gather: table[ids[b, st*tS:(st+1)*tS], :] -> rows_vmem -----
    # tS is a small compile-time constant, so a static loop is fine; all row
    # copies are issued back-to-back (they overlap each other), then waited.
    copies = []
    for i in range(tS):
        tok = ids_ref[b, st * tS + i]
        # TODO(synk): torch.nn.Embedding raises on out-of-range ids; we clamp
        # to avoid an OOB DMA read.
        tok = jnp.clip(tok, 0, V - 1)
        cp = pltpu.make_async_copy(
            table_ref.at[pl.ds(tok, 1), :],
            rows_vmem.at[pl.ds(i, 1), :],
            copy_sems.at[i])
        cp.start()
        copies.append(cp)
    for cp in copies:
        cp.wait()

    # token embedding + positional embedding
    y = rows_vmem[...] + pos_ref[...]                            # (tS, E) f32

    if drop_prob > 0.0:
        # Inverted dropout. Keep-mask from a counter-based integer hash
        # (murmur-style finalizer) compared against an integer threshold:
        # no shift+convert+float-mul chain, scale folded into the select.
        # TODO(synk): RNG stream differs from torch.nn.Dropout's generator
        # (distributionally equivalent Bernoulli(1 - p), p quantized to 2^-24).
        keep_thresh = jnp.int32(int(round(drop_prob * float(1 << 24))))
        row = lax.broadcasted_iota(jnp.int32, (tS, E), 0) + (b * seq_len + st * tS)
        col = lax.broadcasted_iota(jnp.int32, (tS, E), 1)
        h = (row * E + col).astype(jnp.uint32)
        h = h * jnp.uint32(0x9E3779B1) + seed_ref[0].astype(jnp.uint32)
        h = h ^ (h >> 16)
        h = h * jnp.uint32(0x85EBCA6B)
        h = h ^ (h >> 13)
        h = h * jnp.uint32(0xC2B2AE35)
        h = h ^ (h >> 16)
        r24 = (h >> 8).astype(jnp.int32)                         # uniform in [0, 2^24)
        keep = r24 >= keep_thresh
        y = jnp.where(keep, y * jnp.float32(1.0 / (1.0 - drop_prob)), jnp.float32(0.0))

    out_ref[0] = y.astype(out_ref.dtype)


# ---------------------------------------------------------------------------
# Wrapper
# ---------------------------------------------------------------------------
def transformer_embedding(x, table, pos_encoding, *, drop_prob=0.0, seed=0,
                          seq_tile=None):
    """x: (B, S) int token ids -> (B, S, E) float32."""
    B, S = x.shape
    V, E = table.shape

    if seq_tile is None:
        seq_tile = S
        for cand in (512, 256, 128, 64, 32, 16, 8):
            if S % cand == 0:
                seq_tile = cand
                break
    tS = int(seq_tile)
    assert S % tS == 0, "sequence length must be divisible by the seq tile"

    pos = pos_encoding[:S, :]                    # PositionalEmbedding.forward slice
    ids = x.astype(jnp.int32)                    # (B, S) -> SMEM via scalar prefetch
    seed_arr = jnp.array([seed], dtype=jnp.int32)

    kernel = functools.partial(_embedding_kernel,
                               drop_prob=float(drop_prob), seq_len=S)

    itemsize = table.dtype.itemsize
    out_bytes = B * S * E * itemsize
    cost = pl.CostEstimate(
        flops=B * S * E,                          # the positional add
        transcendentals=0,
        # gathered rows + output writeback + pos blocks + ids
        bytes_accessed=2 * out_bytes + S * E * itemsize + B * S * 4)

    return pl.pallas_call(
        kernel,
        out_shape=jax.ShapeDtypeStruct((B, S, E), table.dtype),
        grid_spec=pltpu.PrefetchScalarGridSpec(
            num_scalar_prefetch=2,                # seed, ids -> SMEM
            grid=(B, S // tS),
            in_specs=[
                pl.BlockSpec(memory_space=pl.ANY),                        # table in HBM
                pl.BlockSpec((tS, E), lambda b, st, seed, ids: (st, 0)),  # pos encoding
            ],
            out_specs=pl.BlockSpec((1, tS, E), lambda b, st, seed, ids: (b, st, 0)),
            scratch_shapes=[
                pltpu.VMEM((tS, E), table.dtype),   # gathered embedding rows
                pltpu.SemaphoreType.DMA((tS,)),     # one DMA sem per gathered row
            ]),
        compiler_params=pltpu.CompilerParams(
            dimension_semantics=("parallel", "parallel")),
        cost_estimate=cost,
    )(seed_arr, ids, table, pos)


# ---------------------------------------------------------------------------
# Pure-JAX reference (dropout = identity path) for correctness check
# ---------------------------------------------------------------------------
def _reference(x, table, pos_encoding):
    S = x.shape[1]
    tok = jnp.take(table, x, axis=0)              # (B, S, E)
    return tok + pos_encoding[:S, :][None, :, :]


if __name__ == "__main__":
    vocab_size = 64
    embed_size = 128      # multiple of 128 -> lane-dense, unmasked output stores
    max_len = 32
    batch = 2
    seq = 16
    drop_p = 0.1

    key = jax.random.PRNGKey(0)
    k_tab, k_ids = jax.random.split(key)

    table = make_token_embedding_table(k_tab, vocab_size, embed_size)
    pos_encoding = make_positional_encoding(max_len, embed_size)
    x = jax.random.randint(k_ids, (batch, seq), 0, vocab_size, dtype=jnp.int32)

    # Eval-mode semantics (dropout = identity): exact numerics vs pure-JAX reference.
    out = transformer_embedding(x, table, pos_encoding, drop_prob=0.0, seq_tile=8)
    out = jax.block_until_ready(out)
    ref = jax.block_until_ready(_reference(x, table, pos_encoding))
    assert out.shape == (batch, seq, embed_size)
    assert jnp.allclose(out, ref, atol=1e-5, rtol=1e-5), "mismatch vs reference"

    # Training-mode dropout: every element must be either 0 or ref / (1 - p).
    out_drop = transformer_embedding(x, table, pos_encoding, drop_prob=drop_p,
                                     seed=123, seq_tile=8)
    out_drop = jax.block_until_ready(out_drop)
    scaled = ref / (1.0 - drop_p)
    ok = jnp.isclose(out_drop, scaled, atol=1e-5, rtol=1e-5) | (out_drop == 0.0)
    assert bool(jnp.all(ok)), "dropout output is not in {0, ref/(1-p)}"

    print("KERNEL_OK")
</pallas_src>

<mosaic_0001>
module attributes {stable_mosaic.version = 11 : i64} {
  func.func @_embedding_kernel(%arg0: i32, %arg1: i32, %arg2: memref<1xi32, #tpu.memory_space<smem>>, %arg3: memref<2x16xi32, #tpu.memory_space<smem>>, %arg4: memref<64x128xf32, #tpu.memory_space<any>>, %arg5: memref<8x128xf32, #tpu.memory_space<vmem>>, %arg6: memref<1x8x128xf32, #tpu.memory_space<vmem>>, %arg7: memref<8x128xf32, #tpu.memory_space<vmem>>, %arg8: memref<8x!tpu.dma_semaphore, #tpu.memory_space<semaphore_mem>>) attributes {dimension_semantics = [#tpu.dimension_semantics<parallel>, #tpu.dimension_semantics<parallel>], iteration_bounds = array<i64: 2, 2>, scalar_prefetch = 2 : i64, scratch_operands = 2 : i64, tpu.core_type = #tpu.core_type<tc>, window_params = [{}, {transform_indices = @transform_1, window_bounds = array<i64: 8, 128>}, {transform_indices = @transform_2, window_bounds = array<i64: 1, 8, 128>}]} {
    %c8_i32 = arith.constant 8 : i32
    %0 = arith.muli %arg1, %c8_i32 : i32
    %c0_i32 = arith.constant 0 : i32
    %1 = arith.addi %0, %c0_i32 : i32
    %2 = arith.index_cast %arg0 : i32 to index
    %3 = arith.index_cast %1 : i32 to index
    %4 = memref.load %arg3[%2, %3] : memref<2x16xi32, #tpu.memory_space<smem>>
    %c0_i32_0 = arith.constant 0 : i32
    %c63_i32 = arith.constant 63 : i32
    %5 = arith.maxsi %c0_i32_0, %4 : i32
    %6 = arith.minsi %c63_i32, %5 : i32
    %c0_i32_1 = arith.constant 0 : i32
    %c0_i32_2 = arith.constant 0 : i32
    %7 = tpu.memref_slice %arg4[%6, %c0_i32_2] : memref<64x128xf32, #tpu.memory_space<any>> -> memref<1x128xf32, #tpu.memory_space<any>>
    %c0_i32_3 = arith.constant 0 : i32
    %c0_i32_4 = arith.constant 0 : i32
    %8 = tpu.memref_slice %arg7[%c0_i32_3, %c0_i32_4] : memref<8x128xf32, #tpu.memory_space<vmem>> -> memref<1x128xf32, #tpu.memory_space<vmem>>
    %9 = tpu.memref_slice %arg8[%c0_i32_1] : memref<8x!tpu.dma_semaphore, #tpu.memory_space<semaphore_mem>> -> memref<1x!tpu.dma_semaphore, #tpu.memory_space<semaphore_mem>>
    %10 = tpu.memref_squeeze %9 : memref<1x!tpu.dma_semaphore, #tpu.memory_space<semaphore_mem>> -> memref<!tpu.dma_semaphore, #tpu.memory_space<semaphore_mem>>
    tpu.enqueue_dma source(%7 : memref<1x128xf32, #tpu.memory_space<any>>) target(%8 : memref<1x128xf32, #tpu.memory_space<vmem>>) target_semaphore(%10 : memref<!tpu.dma_semaphore, #tpu.memory_space<semaphore_mem>>)
    %c8_i32_5 = arith.constant 8 : i32
    %11 = arith.muli %arg1, %c8_i32_5 : i32
    %c1_i32 = arith.constant 1 : i32
    %12 = arith.addi %11, %c1_i32 : i32
    %13 = arith.index_cast %arg0 : i32 to index
    %14 = arith.index_cast %12 : i32 to index
    %15 = memref.load %arg3[%13, %14] : memref<2x16xi32, #tpu.memory_space<smem>>
    %c0_i32_6 = arith.constant 0 : i32
    %c63_i32_7 = arith.constant 63 : i32
    %16 = arith.maxsi %c0_i32_6, %15 : i32
    %17 = arith.minsi %c63_i32_7, %16 : i32
    %c1_i32_8 = arith.constant 1 : i32
    %c0_i32_9 = arith.constant 0 : i32
    %18 = tpu.memref_slice %arg4[%17, %c0_i32_9] : memref<64x128xf32, #tpu.memory_space<any>> -> memref<1x128xf32, #tpu.memory_space<any>>
    %c1_i32_10 = arith.constant 1 : i32
    %c0_i32_11 = arith.constant 0 : i32
    %19 = tpu.memref_slice %arg7[%c1_i32_10, %c0_i32_11] : memref<8x128xf32, #tpu.memory_space<vmem>> -> memref<1x128xf32, #tpu.memory_space<vmem>>
    %20 = tpu.memref_slice %arg8[%c1_i32_8] : memref<8x!tpu.dma_semaphore, #tpu.memory_space<semaphore_mem>> -> memref<1x!tpu.dma_semaphore, #tpu.memory_space<semaphore_mem>>
    %21 = tpu.memref_squeeze %20 : memref<1x!tpu.dma_semaphore, #tpu.memory_space<semaphore_mem>> -> memref<!tpu.dma_semaphore, #tpu.memory_space<semaphore_mem>>
    tpu.enqueue_dma source(%18 : memref<1x128xf32, #tpu.memory_space<any>>) target(%19 : memref<1x128xf32, #tpu.memory_space<vmem>>) target_semaphore(%21 : memref<!tpu.dma_semaphore, #tpu.memory_space<semaphore_mem>>)
    %c8_i32_12 = arith.constant 8 : i32
    %22 = arith.muli %arg1, %c8_i32_12 : i32
    %c2_i32 = arith.constant 2 : i32
    %23 = arith.addi %22, %c2_i32 : i32
    %24 = arith.index_cast %arg0 : i32 to index
    %25 = arith.index_cast %23 : i32 to index
    %26 = memref.load %arg3[%24, %25] : memref<2x16xi32, #tpu.memory_space<smem>>
    %c0_i32_13 = arith.constant 0 : i32
    %c63_i32_14 = arith.constant 63 : i32
    %27 = arith.maxsi %c0_i32_13, %26 : i32
    %28 = arith.minsi %c63_i32_14, %27 : i32
    %c2_i32_15 = arith.constant 2 : i32
    %c0_i32_16 = arith.constant 0 : i32
    %29 = tpu.memref_slice %arg4[%28, %c0_i32_16] : memref<64x128xf32, #tpu.memory_space<any>> -> memref<1x128xf32, #tpu.memory_space<any>>
    %c2_i32_17 = arith.constant 2 : i32
    %c0_i32_18 = arith.constant 0 : i32
    %30 = tpu.memref_slice %arg7[%c2_i32_17, %c0_i32_18] : memref<8x128xf32, #tpu.memory_space<vmem>> -> memref<1x128xf32, #tpu.memory_space<vmem>>
    %31 = tpu.memref_slice %arg8[%c2_i32_15] : memref<8x!tpu.dma_semaphore, #tpu.memory_space<semaphore_mem>> -> memref<1x!tpu.dma_semaphore, #tpu.memory_space<semaphore_mem>>
    %32 = tpu.memref_squeeze %31 : memref<1x!tpu.dma_semaphore, #tpu.memory_space<semaphore_mem>> -> memref<!tpu.dma_semaphore, #tpu.memory_space<semaphore_mem>>
    tpu.enqueue_dma source(%29 : memref<1x128xf32, #tpu.memory_space<any>>) target(%30 : memref<1x128xf32, #tpu.memory_space<vmem>>) target_semaphore(%32 : memref<!tpu.dma_semaphore, #tpu.memory_space<semaphore_mem>>)
    %c8_i32_19 = arith.constant 8 : i32
    %33 = arith.muli %arg1, %c8_i32_19 : i32
    %c3_i32 = arith.constant 3 : i32
    %34 = arith.addi %33, %c3_i32 : i32
    %35 = arith.index_cast %arg0 : i32 to index
    %36 = arith.index_cast %34 : i32 to index
    %37 = memref.load %arg3[%35, %36] : memref<2x16xi32, #tpu.memory_space<smem>>
    %c0_i32_20 = arith.constant 0 : i32
    %c63_i32_21 = arith.constant 63 : i32
    %38 = arith.maxsi %c0_i32_20, %37 : i32
    %39 = arith.minsi %c63_i32_21, %38 : i32
    %c3_i32_22 = arith.constant 3 : i32
    %c0_i32_23 = arith.constant 0 : i32
    %40 = tpu.memref_slice %arg4[%39, %c0_i32_23] : memref<64x128xf32, #tpu.memory_space<any>> -> memref<1x128xf32, #tpu.memory_space<any>>
    %c3_i32_24 = arith.constant 3 : i32
    %c0_i32_25 = arith.constant 0 : i32
    %41 = tpu.memref_slice %arg7[%c3_i32_24, %c0_i32_25] : memref<8x128xf32, #tpu.memory_space<vmem>> -> memref<1x128xf32, #tpu.memory_space<vmem>>
    %42 = tpu.memref_slice %arg8[%c3_i32_22] : memref<8x!tpu.dma_semaphore, #tpu.memory_space<semaphore_mem>> -> memref<1x!tpu.dma_semaphore, #tpu.memory_space<semaphore_mem>>
    %43 = tpu.memref_squeeze %42 : memref<1x!tpu.dma_semaphore, #tpu.memory_space<semaphore_mem>> -> memref<!tpu.dma_semaphore, #tpu.memory_space<semaphore_mem>>
    tpu.enqueue_dma source(%40 : memref<1x128xf32, #tpu.memory_space<any>>) target(%41 : memref<1x128xf32, #tpu.memory_space<vmem>>) target_semaphore(%43 : memref<!tpu.dma_semaphore, #tpu.memory_space<semaphore_mem>>)
    %c8_i32_26 = arith.constant 8 : i32
    %44 = arith.muli %arg1, %c8_i32_26 : i32
    %c4_i32 = arith.constant 4 : i32
    %45 = arith.addi %44, %c4_i32 : i32
    %46 = arith.index_cast %arg0 : i32 to index
    %47 = arith.index_cast %45 : i32 to index
    %48 = memref.load %arg3[%46, %47] : memref<2x16xi32, #tpu.memory_space<smem>>
    %c0_i32_27 = arith.constant 0 : i32
    %c63_i32_28 = arith.constant 63 : i32
    %49 = arith.maxsi %c0_i32_27, %48 : i32
    %50 = arith.minsi %c63_i32_28, %49 : i32
    %c4_i32_29 = arith.constant 4 : i32
    %c0_i32_30 = arith.constant 0 : i32
    %51 = tpu.memref_slice %arg4[%50, %c0_i32_30] : memref<64x128xf32, #tpu.memory_space<any>> -> memref<1x128xf32, #tpu.memory_space<any>>
    %c4_i32_31 = arith.constant 4 : i32
    %c0_i32_32 = arith.constant 0 : i32
    %52 = tpu.memref_slice %arg7[%c4_i32_31, %c0_i32_32] : memref<8x128xf32, #tpu.memory_space<vmem>> -> memref<1x128xf32, #tpu.memory_space<vmem>>
    %53 = tpu.memref_slice %arg8[%c4_i32_29] : memref<8x!tpu.dma_semaphore, #tpu.memory_space<semaphore_mem>> -> memref<1x!tpu.dma_semaphore, #tpu.memory_space<semaphore_mem>>
    %54 = tpu.memref_squeeze %53 : memref<1x!tpu.dma_semaphore, #tpu.memory_space<semaphore_mem>> -> memref<!tpu.dma_semaphore, #tpu.memory_space<semaphore_mem>>
    tpu.enqueue_dma source(%51 : memref<1x128xf32, #tpu.memory_space<any>>) target(%52 : memref<1x128xf32, #tpu.memory_space<vmem>>) target_semaphore(%54 : memref<!tpu.dma_semaphore, #tpu.memory_space<semaphore_mem>>)
    %c8_i32_33 = arith.constant 8 : i32
    %55 = arith.muli %arg1, %c8_i32_33 : i32
    %c5_i32 = arith.constant 5 : i32
    %56 = arith.addi %55, %c5_i32 : i32
    %57 = arith.index_cast %arg0 : i32 to index
    %58 = arith.index_cast %56 : i32 to index
    %59 = memref.load %arg3[%57, %58] : memref<2x16xi32, #tpu.memory_space<smem>>
    %c0_i32_34 = arith.constant 0 : i32
    %c63_i32_35 = arith.constant 63 : i32
    %60 = arith.maxsi %c0_i32_34, %59 : i32
    %61 = arith.minsi %c63_i32_35, %60 : i32
    %c5_i32_36 = arith.constant 5 : i32
    %c0_i32_37 = arith.constant 0 : i32
    %62 = tpu.memref_slice %arg4[%61, %c0_i32_37] : memref<64x128xf32, #tpu.memory_space<any>> -> memref<1x128xf32, #tpu.memory_space<any>>
    %c5_i32_38 = arith.constant 5 : i32
    %c0_i32_39 = arith.constant 0 : i32
    %63 = tpu.memref_slice %arg7[%c5_i32_38, %c0_i32_39] : memref<8x128xf32, #tpu.memory_space<vmem>> -> memref<1x128xf32, #tpu.memory_space<vmem>>
    %64 = tpu.memref_slice %arg8[%c5_i32_36] : memref<8x!tpu.dma_semaphore, #tpu.memory_space<semaphore_mem>> -> memref<1x!tpu.dma_semaphore, #tpu.memory_space<semaphore_mem>>
    %65 = tpu.memref_squeeze %64 : memref<1x!tpu.dma_semaphore, #tpu.memory_space<semaphore_mem>> -> memref<!tpu.dma_semaphore, #tpu.memory_space<semaphore_mem>>
    tpu.enqueue_dma source(%62 : memref<1x128xf32, #tpu.memory_space<any>>) target(%63 : memref<1x128xf32, #tpu.memory_space<vmem>>) target_semaphore(%65 : memref<!tpu.dma_semaphore, #tpu.memory_space<semaphore_mem>>)
    %c8_i32_40 = arith.constant 8 : i32
    %66 = arith.muli %arg1, %c8_i32_40 : i32
    %c6_i32 = arith.constant 6 : i32
    %67 = arith.addi %66, %c6_i32 : i32
    %68 = arith.index_cast %arg0 : i32 to index
    %69 = arith.index_cast %67 : i32 to index
    %70 = memref.load %arg3[%68, %69] : memref<2x16xi32, #tpu.memory_space<smem>>
    %c0_i32_41 = arith.constant 0 : i32
    %c63_i32_42 = arith.constant 63 : i32
    %71 = arith.maxsi %c0_i32_41, %70 : i32
    %72 = arith.minsi %c63_i32_42, %71 : i32
    %c6_i32_43 = arith.constant 6 : i32
    %c0_i32_44 = arith.constant 0 : i32
    %73 = tpu.memref_slice %arg4[%72, %c0_i32_44] : memref<64x128xf32, #tpu.memory_space<any>> -> memref<1x128xf32, #tpu.memory_space<any>>
    %c6_i32_45 = arith.constant 6 : i32
    %c0_i32_46 = arith.constant 0 : i32
    %74 = tpu.memref_slice %arg7[%c6_i32_45, %c0_i32_46] : memref<8x128xf32, #tpu.memory_space<vmem>> -> memref<1x128xf32, #tpu.memory_space<vmem>>
    %75 = tpu.memref_slice %arg8[%c6_i32_43] : memref<8x!tpu.dma_semaphore, #tpu.memory_space<semaphore_mem>> -> memref<1x!tpu.dma_semaphore, #tpu.memory_space<semaphore_mem>>
    %76 = tpu.memref_squeeze %75 : memref<1x!tpu.dma_semaphore, #tpu.memory_space<semaphore_mem>> -> memref<!tpu.dma_semaphore, #tpu.memory_space<semaphore_mem>>
    tpu.enqueue_dma source(%73 : memref<1x128xf32, #tpu.memory_space<any>>) target(%74 : memref<1x128xf32, #tpu.memory_space<vmem>>) target_semaphore(%76 : memref<!tpu.dma_semaphore, #tpu.memory_space<semaphore_mem>>)
    %c8_i32_47 = arith.constant 8 : i32
    %77 = arith.muli %arg1, %c8_i32_47 : i32
    %c7_i32 = arith.constant 7 : i32
    %78 = arith.addi %77, %c7_i32 : i32
    %79 = arith.index_cast %arg0 : i32 to index
    %80 = arith.index_cast %78 : i32 to index
    %81 = memref.load %arg3[%79, %80] : memref<2x16xi32, #tpu.memory_space<smem>>
    %c0_i32_48 = arith.constant 0 : i32
    %c63_i32_49 = arith.constant 63 : i32
    %82 = arith.maxsi %c0_i32_48, %81 : i32
    %83 = arith.minsi %c63_i32_49, %82 : i32
    %c7_i32_50 = arith.constant 7 : i32
    %c0_i32_51 = arith.constant 0 : i32
    %84 = tpu.memref_slice %arg4[%83, %c0_i32_51] : memref<64x128xf32, #tpu.memory_space<any>> -> memref<1x128xf32, #tpu.memory_space<any>>
    %c7_i32_52 = arith.constant 7 : i32
    %c0_i32_53 = arith.constant 0 : i32
    %85 = tpu.memref_slice %arg7[%c7_i32_52, %c0_i32_53] : memref<8x128xf32, #tpu.memory_space<vmem>> -> memref<1x128xf32, #tpu.memory_space<vmem>>
    %86 = tpu.memref_slice %arg8[%c7_i32_50] : memref<8x!tpu.dma_semaphore, #tpu.memory_space<semaphore_mem>> -> memref<1x!tpu.dma_semaphore, #tpu.memory_space<semaphore_mem>>
    %87 = tpu.memref_squeeze %86 : memref<1x!tpu.dma_semaphore, #tpu.memory_space<semaphore_mem>> -> memref<!tpu.dma_semaphore, #tpu.memory_space<semaphore_mem>>
    tpu.enqueue_dma source(%84 : memref<1x128xf32, #tpu.memory_space<any>>) target(%85 : memref<1x128xf32, #tpu.memory_space<vmem>>) target_semaphore(%87 : memref<!tpu.dma_semaphore, #tpu.memory_space<semaphore_mem>>)
    %c0_i32_54 = arith.constant 0 : i32
    %c0_i32_55 = arith.constant 0 : i32
    %88 = tpu.memref_slice %arg4[%6, %c0_i32_55] : memref<64x128xf32, #tpu.memory_space<any>> -> memref<1x128xf32, #tpu.memory_space<any>>
    %c0_i32_56 = arith.constant 0 : i32
    %c0_i32_57 = arith.constant 0 : i32
    %89 = tpu.memref_slice %arg7[%c0_i32_56, %c0_i32_57] : memref<8x128xf32, #tpu.memory_space<vmem>> -> memref<1x128xf32, #tpu.memory_space<vmem>>
    %90 = tpu.memref_slice %arg8[%c0_i32_54] : memref<8x!tpu.dma_semaphore, #tpu.memory_space<semaphore_mem>> -> memref<1x!tpu.dma_semaphore, #tpu.memory_space<semaphore_mem>>
    %91 = tpu.memref_squeeze %90 : memref<1x!tpu.dma_semaphore, #tpu.memory_space<semaphore_mem>> -> memref<!tpu.dma_semaphore, #tpu.memory_space<semaphore_mem>>
    tpu.wait_dma2 semaphore(%91 : memref<!tpu.dma_semaphore, #tpu.memory_space<semaphore_mem>>) src(%88 : memref<1x128xf32, #tpu.memory_space<any>>) dst(%89 : memref<1x128xf32, #tpu.memory_space<vmem>>)
    %c1_i32_58 = arith.constant 1 : i32
    %c0_i32_59 = arith.constant 0 : i32
    %92 = tpu.memref_slice %arg4[%17, %c0_i32_59] : memref<64x128xf32, #tpu.memory_space<any>> -> memref<1x128xf32, #tpu.memory_space<any>>
    %c1_i32_60 = arith.constant 1 : i32
    %c0_i32_61 = arith.constant 0 : i32
    %93 = tpu.memref_slice %arg7[%c1_i32_60, %c0_i32_61] : memref<8x128xf32, #tpu.memory_space<vmem>> -> memref<1x128xf32, #tpu.memory_space<vmem>>
    %94 = tpu.memref_slice %arg8[%c1_i32_58] : memref<8x!tpu.dma_semaphore, #tpu.memory_space<semaphore_mem>> -> memref<1x!tpu.dma_semaphore, #tpu.memory_space<semaphore_mem>>
    %95 = tpu.memref_squeeze %94 : memref<1x!tpu.dma_semaphore, #tpu.memory_space<semaphore_mem>> -> memref<!tpu.dma_semaphore, #tpu.memory_space<semaphore_mem>>
    tpu.wait_dma2 semaphore(%95 : memref<!tpu.dma_semaphore, #tpu.memory_space<semaphore_mem>>) src(%92 : memref<1x128xf32, #tpu.memory_space<any>>) dst(%93 : memref<1x128xf32, #tpu.memory_space<vmem>>)
    %c2_i32_62 = arith.constant 2 : i32
    %c0_i32_63 = arith.constant 0 : i32
    %96 = tpu.memref_slice %arg4[%28, %c0_i32_63] : memref<64x128xf32, #tpu.memory_space<any>> -> memref<1x128xf32, #tpu.memory_space<any>>
    %c2_i32_64 = arith.constant 2 : i32
    %c0_i32_65 = arith.constant 0 : i32
    %97 = tpu.memref_slice %arg7[%c2_i32_64, %c0_i32_65] : memref<8x128xf32, #tpu.memory_space<vmem>> -> memref<1x128xf32, #tpu.memory_space<vmem>>
    %98 = tpu.memref_slice %arg8[%c2_i32_62] : memref<8x!tpu.dma_semaphore, #tpu.memory_space<semaphore_mem>> -> memref<1x!tpu.dma_semaphore, #tpu.memory_space<semaphore_mem>>
    %99 = tpu.memref_squeeze %98 : memref<1x!tpu.dma_semaphore, #tpu.memory_space<semaphore_mem>> -> memref<!tpu.dma_semaphore, #tpu.memory_space<semaphore_mem>>
    tpu.wait_dma2 semaphore(%99 : memref<!tpu.dma_semaphore, #tpu.memory_space<semaphore_mem>>) src(%96 : memref<1x128xf32, #tpu.memory_space<any>>) dst(%97 : memref<1x128xf32, #tpu.memory_space<vmem>>)
    %c3_i32_66 = arith.constant 3 : i32
    %c0_i32_67 = arith.constant 0 : i32
    %100 = tpu.memref_slice %arg4[%39, %c0_i32_67] : memref<64x128xf32, #tpu.memory_space<any>> -> memref<1x128xf32, #tpu.memory_space<any>>
    %c3_i32_68 = arith.constant 3 : i32
    %c0_i32_69 = arith.constant 0 : i32
    %101 = tpu.memref_slice %arg7[%c3_i32_68, %c0_i32_69] : memref<8x128xf32, #tpu.memory_space<vmem>> -> memref<1x128xf32, #tpu.memory_space<vmem>>
    %102 = tpu.memref_slice %arg8[%c3_i32_66] : memref<8x!tpu.dma_semaphore, #tpu.memory_space<semaphore_mem>> -> memref<1x!tpu.dma_semaphore, #tpu.memory_space<semaphore_mem>>
    %103 = tpu.memref_squeeze %102 : memref<1x!tpu.dma_semaphore, #tpu.memory_space<semaphore_mem>> -> memref<!tpu.dma_semaphore, #tpu.memory_space<semaphore_mem>>
    tpu.wait_dma2 semaphore(%103 : memref<!tpu.dma_semaphore, #tpu.memory_space<semaphore_mem>>) src(%100 : memref<1x128xf32, #tpu.memory_space<any>>) dst(%101 : memref<1x128xf32, #tpu.memory_space<vmem>>)
    %c4_i32_70 = arith.constant 4 : i32
    %c0_i32_71 = arith.constant 0 : i32
    %104 = tpu.memref_slice %arg4[%50, %c0_i32_71] : memref<64x128xf32, #tpu.memory_space<any>> -> memref<1x128xf32, #tpu.memory_space<any>>
    %c4_i32_72 = arith.constant 4 : i32
    %c0_i32_73 = arith.constant 0 : i32
    %105 = tpu.memref_slice %arg7[%c4_i32_72, %c0_i32_73] : memref<8x128xf32, #tpu.memory_space<vmem>> -> memref<1x128xf32, #tpu.memory_space<vmem>>
    %106 = tpu.memref_slice %arg8[%c4_i32_70] : memref<8x!tpu.dma_semaphore, #tpu.memory_space<semaphore_mem>> -> memref<1x!tpu.dma_semaphore, #tpu.memory_space<semaphore_mem>>
    %107 = tpu.memref_squeeze %106 : memref<1x!tpu.dma_semaphore, #tpu.memory_space<semaphore_mem>> -> memref<!tpu.dma_semaphore, #tpu.memory_space<semaphore_mem>>
    tpu.wait_dma2 semaphore(%107 : memref<!tpu.dma_semaphore, #tpu.memory_space<semaphore_mem>>) src(%104 : memref<1x128xf32, #tpu.memory_space<any>>) dst(%105 : memref<1x128xf32, #tpu.memory_space<vmem>>)
    %c5_i32_74 = arith.constant 5 : i32
    %c0_i32_75 = arith.constant 0 : i32
    %108 = tpu.memref_slice %arg4[%61, %c0_i32_75] : memref<64x128xf32, #tpu.memory_space<any>> -> memref<1x128xf32, #tpu.memory_space<any>>
    %c5_i32_76 = arith.constant 5 : i32
    %c0_i32_77 = arith.constant 0 : i32
    %109 = tpu.memref_slice %arg7[%c5_i32_76, %c0_i32_77] : memref<8x128xf32, #tpu.memory_space<vmem>> -> memref<1x128xf32, #tpu.memory_space<vmem>>
    %110 = tpu.memref_slice %arg8[%c5_i32_74] : memref<8x!tpu.dma_semaphore, #tpu.memory_space<semaphore_mem>> -> memref<1x!tpu.dma_semaphore, #tpu.memory_space<semaphore_mem>>
    %111 = tpu.memref_squeeze %110 : memref<1x!tpu.dma_semaphore, #tpu.memory_space<semaphore_mem>> -> memref<!tpu.dma_semaphore, #tpu.memory_space<semaphore_mem>>
    tpu.wait_dma2 semaphore(%111 : memref<!tpu.dma_semaphore, #tpu.memory_space<semaphore_mem>>) src(%108 : memref<1x128xf32, #tpu.memory_space<any>>) dst(%109 : memref<1x128xf32, #tpu.memory_space<vmem>>)
    %c6_i32_78 = arith.constant 6 : i32
    %c0_i32_79 = arith.constant 0 : i32
    %112 = tpu.memref_slice %arg4[%72, %c0_i32_79] : memref<64x128xf32, #tpu.memory_space<any>> -> memref<1x128xf32, #tpu.memory_space<any>>
    %c6_i32_80 = arith.constant 6 : i32
    %c0_i32_81 = arith.constant 0 : i32
    %113 = tpu.memref_slice %arg7[%c6_i32_80, %c0_i32_81] : memref<8x128xf32, #tpu.memory_space<vmem>> -> memref<1x128xf32, #tpu.memory_space<vmem>>
    %114 = tpu.memref_slice %arg8[%c6_i32_78] : memref<8x!tpu.dma_semaphore, #tpu.memory_space<semaphore_mem>> -> memref<1x!tpu.dma_semaphore, #tpu.memory_space<semaphore_mem>>
    %115 = tpu.memref_squeeze %114 : memref<1x!tpu.dma_semaphore, #tpu.memory_space<semaphore_mem>> -> memref<!tpu.dma_semaphore, #tpu.memory_space<semaphore_mem>>
    tpu.wait_dma2 semaphore(%115 : memref<!tpu.dma_semaphore, #tpu.memory_space<semaphore_mem>>) src(%112 : memref<1x128xf32, #tpu.memory_space<any>>) dst(%113 : memref<1x128xf32, #tpu.memory_space<vmem>>)
    %c7_i32_82 = arith.constant 7 : i32
    %c0_i32_83 = arith.constant 0 : i32
    %116 = tpu.memref_slice %arg4[%83, %c0_i32_83] : memref<64x128xf32, #tpu.memory_space<any>> -> memref<1x128xf32, #tpu.memory_space<any>>
    %c7_i32_84 = arith.constant 7 : i32
    %c0_i32_85 = arith.constant 0 : i32
    %117 = tpu.memref_slice %arg7[%c7_i32_84, %c0_i32_85] : memref<8x128xf32, #tpu.memory_space<vmem>> -> memref<1x128xf32, #tpu.memory_space<vmem>>
    %118 = tpu.memref_slice %arg8[%c7_i32_82] : memref<8x!tpu.dma_semaphore, #tpu.memory_space<semaphore_mem>> -> memref<1x!tpu.dma_semaphore, #tpu.memory_space<semaphore_mem>>
    %119 = tpu.memref_squeeze %118 : memref<1x!tpu.dma_semaphore, #tpu.memory_space<semaphore_mem>> -> memref<!tpu.dma_semaphore, #tpu.memory_space<semaphore_mem>>
    tpu.wait_dma2 semaphore(%119 : memref<!tpu.dma_semaphore, #tpu.memory_space<semaphore_mem>>) src(%116 : memref<1x128xf32, #tpu.memory_space<any>>) dst(%117 : memref<1x128xf32, #tpu.memory_space<vmem>>)
    %c0 = arith.constant 0 : index
    %c0_86 = arith.constant 0 : index
    %120 = vector.load %arg7[%c0, %c0_86] : memref<8x128xf32, #tpu.memory_space<vmem>>, vector<8x128xf32>
    %c0_87 = arith.constant 0 : index
    %c0_88 = arith.constant 0 : index
    %121 = vector.load %arg5[%c0_87, %c0_88] : memref<8x128xf32, #tpu.memory_space<vmem>>, vector<8x128xf32>
    %122 = arith.addf %120, %121 : vector<8x128xf32>
    %c0_89 = arith.constant 0 : index
    %c0_90 = arith.constant 0 : index
    %c0_91 = arith.constant 0 : index
    %123 = vector.load %arg6[%c0_89, %c0_90, %c0_91] : memref<1x8x128xf32, #tpu.memory_space<vmem>>, vector<1x8x128xf32>
    %124 = vector.shape_cast %123 : vector<1x8x128xf32> to vector<8x128xf32>
    %125 = vector.shape_cast %122 : vector<8x128xf32> to vector<1x8x128xf32>
    tpu.vector_store %arg6[%c0_89, %c0_90, %c0_91], %125 {strides = array<i32>} : memref<1x8x128xf32, #tpu.memory_space<vmem>>, vector<1x8x128xf32>,
    return
  }
  func.func @transform_1(%arg0: i32, %arg1: i32, %arg2: memref<1xi32, #tpu.memory_space<smem>>, %arg3: memref<2x16xi32, #tpu.memory_space<smem>>) -> (i32, i32) {
    %c0_i32 = arith.constant 0 : i32
    %c0_i32_0 = arith.constant 0 : i32
    return %arg1, %c0_i32 : i32, i32
  }
  func.func @transform_2(%arg0: i32, %arg1: i32, %arg2: memref<1xi32, #tpu.memory_space<smem>>, %arg3: memref<2x16xi32, #tpu.memory_space<smem>>) -> (i32, i32, i32) {
    %c0_i32 = arith.constant 0 : i32
    %c0_i32_0 = arith.constant 0 : i32
    return %arg0, %arg1, %c0_i32 : i32, i32, i32
  }
}

</mosaic_0001>

<llo_original>
// kernel: tpu_custom_call.1
$region0: #{tpu_custom_call.1}
  #allocation0 [shape = 'u32[]', space=smem, size = 0x4, offset = 0x4, fixed_abs, tag = 'smem constant byte address 0x4 - core index']
  #allocation1 [shape = 'u32[144,128]{1,0:T(1,128)}', space=vmem, size = 0x12000, scoped, tag = 'internal scratch']
  #allocation2 [shape = 'f32[8,128]{1,0:T(8,128)}', space=vmem, size = 0x1000, scoped, tag = 'scratch operand']
  #allocation3 [shape = 's32[8]{0}', space=sflag, size = 0x20, scoped, tag = 'scratch operand']
  #allocation4 [shape = 's32[1]{0}', space=sflag, size = 0x4, scoped, tag = 'scoped memory for tpu_custom_call.1']
  #allocation5 [shape = 's32[1]{0:T(128)S(6)}', space=smem, size = 0x200, scoped, tag = 'prefetched SMEM operand 0']
  #allocation6 [shape = 'u8[1024]{0}', space=smem, size = 0x400, scoped, tag = 'prefetched SMEM operand 1']
  #allocation11 [shape = 's32[]', space=sflag, size = 0x4, offset = 0, fixed_abs, tag = 'sflag constant byte address 0x0 - dummy sync flag']
  #allocation12 [shape = 's32[]', space=sflag, size = 0x4, offset = 0, fixed_abs, tag = 'sflag constant byte address 0x0 - dummy sync flag']
  #allocation13 [shape = 'u32[]', space=smem, size = 0x4, offset = 0x44, fixed_abs, tag = 'smem constant byte address 0x44 - assertion arg 0']
  #allocation14 [shape = 'u32[]', space=smem, size = 0x4, offset = 0x48, fixed_abs, tag = 'smem constant byte address 0x48 - assertion arg 1']
  #allocation15 [shape = 's32[]', space=sflag, size = 0x4, offset = 0, fixed_abs, tag = 'sflag constant byte address 0x0 - dummy sync flag']
  #allocation16 [shape = 's32[]', space=sflag, size = 0x4, offset = 0, fixed_abs, tag = 'sflag constant byte address 0x0 - dummy sync flag']
  #allocation17 [shape = 's32[]', space=sflag, size = 0x4, offset = 0, fixed_abs, tag = 'sflag constant byte address 0x0 - dummy sync flag']
  #allocation18 [shape = 's32[]', space=sflag, size = 0x4, offset = 0, fixed_abs, tag = 'sflag constant byte address 0x0 - dummy sync flag']
  #allocation19 [shape = 's32[]', space=sflag, size = 0x4, offset = 0, fixed_abs, tag = 'sflag constant byte address 0x0 - dummy sync flag']
  #allocation20 [shape = 's32[]', space=sflag, size = 0x4, offset = 0, fixed_abs, tag = 'sflag constant byte address 0x0 - dummy sync flag']
  #allocation21 [shape = 's32[]', space=sflag, size = 0x4, offset = 0, fixed_abs, tag = 'sflag constant byte address 0x0 - dummy sync flag']
  #allocation22 [shape = 's32[]', space=sflag, size = 0x4, offset = 0, fixed_abs, tag = 'sflag constant byte address 0x0 - dummy sync flag']
  #allocation23 [shape = 's32[]', space=sflag, size = 0x4, offset = 0, fixed_abs, tag = 'sflag constant byte address 0x0 - dummy sync flag']
  #allocation24 [shape = 's32[]', space=sflag, size = 0x4, offset = 0, fixed_abs, tag = 'sflag constant byte address 0x0 - dummy sync flag']
  #allocation25 [shape = 's32[]', space=sflag, size = 0x4, offset = 0, fixed_abs, tag = 'sflag constant byte address 0x0 - dummy sync flag']
  #allocation26 [shape = 's32[]', space=sflag, size = 0x4, offset = 0, fixed_abs, tag = 'sflag constant byte address 0x0 - dummy sync flag']
  #allocation27 [shape = 's32[]', space=sflag, size = 0x4, offset = 0, fixed_abs, tag = 'sflag constant byte address 0x0 - dummy sync flag']
  #allocation28 [shape = 's32[]', space=sflag, size = 0x4, offset = 0, fixed_abs, tag = 'sflag constant byte address 0x0 - dummy sync flag']
  %s0 = inlined_call_operand.<no memory space> [shape: s32[1], index: 0, kind: input, shape index: {}]
  %s1 = inlined_call_operand.vmem [shape: s32[2,16], index: 1, kind: input, shape index: {}]
  %s2 = inlined_call_operand.hbm [shape: f32[64,128], index: 2, kind: input, shape index: {}]
  %s3 = inlined_call_operand.hbm [shape: f32[16,128], index: 3, kind: input, shape index: {}]
  %s4 = inlined_call_operand.hbm [shape: f32[2,16,128], index: 4, kind: output, shape index: {}]
  %s5 = sld [smem:[#allocation0]]
  $region73: #{tpu_custom_call.1} parent=0
    _
  %s7 = ssub.s32 1, %s5
  %s8 = scalar_select 0, %s7, %s5
  %9 = sst [smem:[#allocation5]] %s0
  %s10 = sshll.u32 %s1, 4
  %s11 = int_to_ptr.vmem [resolvable:$true] %s10
  %13 = dma.vmem_to_smem %s11, 32, [#allocation6], [#allocation4]
  %14 = dma.done [#allocation4], 32
  %15 = sfence
  $region1: #{tpu_custom_call.1} parent=0
    #allocation7 [shape = 'u8[8192]{0}', space=vmem, size = 0x2000, scoped, tag = 'input window, operand 3']
    #allocation8 [shape = 's32[2]{0}', space=sflag, size = 0x8, scoped, tag = 'scoped memory for tpu_custom_call.1']
    #allocation9 [shape = 's32[2]{0}', space=sflag, size = 0x8, scoped, tag = 'scoped memory for tpu_custom_call.1']
    #allocation10 [shape = 'u8[8192]{0}', space=vmem, size = 0x2000, scoped, tag = 'output window, operand 0']
    %16 = vsyncpa [#allocation8], 0
    %s17 = scalar_lea.sflag [#allocation8], 1
    %18 = vsyncpa %s17, 0
    %19 = vsyncpa [#allocation9], 0
    %s20 = scalar_lea.sflag [#allocation9], 1
    %21 = vsyncpa %s20, 0
    loop: start=0, step=1, limit=6
    $region2: #{tpu_custom_call.1} parent=1 // loop_pre_header
      _
    $region3: #{tpu_custom_call.1} parent=1 // loop_header
      %s23 = sphi 0, %s27
      %p24 = scmp.ge.s32.totalorder %s23, 6
      %s30 = sphi 0, %s42
      %s31 = sphi 0, %s38
      %s32 = sphi 0, %s30
      %s33 = sphi 0, %s31
      %s34 = sphi 0, %s32
      %s35 = sphi 0, %s33
      %s45 = sphi 0, %s47
      %s48 = sphi 0, %s45
      %s49 = sphi 0, %s48
      %s65 = sphi 0, %s49
      %s73 = sphi 0, %s75
      %s76 = sphi 0, %s73
      %s77 = sphi 0, %s76
      %s93 = sphi 0, %s77
    $region4: #{tpu_custom_call.1} parent=1 // loop_header_branch
      %26 = sbr.rel (%p24) target = $region8
    $region5: #{tpu_custom_call.1} parent=1 // loop_body
      %s28 = ssub.s32 %s23, 1
      %s29 = ssub.s32 %s23, 2
      %s36 = sadd.s32 1, %s31
      %p37 = scmp.ge.s32.totalorder %s36, 2
      %s38 = scalar_select %p37, 0, %s36
      %s39 = sadd.s32 1, %s30
      %s40 = scalar_select %p37, %s39, %s30
      %p41 = scmp.ge.s32.totalorder %s40, 2
      %s42 = scalar_select %p41, 0, %s40
      %s43 = ssub.s32 %s31, %s38
      %p44 = scmp.eq.s32.totalorder %s43, 0
      %s46 = sadd.s32 %s45, 1
      %s47 = scalar_select %p44, %s45, %s46
      %p50 = pneg %p44
      %p51 = scmp.eq.s32.totalorder %s23, 3
      %p52 = por %p50, %p51
      %p53 = scmp.ne.s32.totalorder %s45, %s48
      %p54 = scmp.eq.s32.totalorder %s23, 0
      %p55 = por %p53, %p54
      %p56 = scmp.ne.s32.totalorder %s45, %s48
      %p57 = scmp.eq.s32.totalorder %s28, 3
      %p58 = por %p56, %p57
      %p59 = scmp.ne.s32.totalorder %s48, %s49
      %p60 = scmp.eq.s32.totalorder %s28, 0
      %p61 = por %p59, %p60
      %p62 = scmp.ne.s32.totalorder %s48, %s49
      %p63 = scmp.eq.s32.totalorder %s29, 3
      %p64 = por %p62, %p63
      %p66 = scmp.ne.s32.totalorder %s49, %s65
      %p67 = scmp.eq.s32.totalorder %s29, 0
      %p68 = por %p66, %p67
      %s69 = ssub.s32 %s30, %s42
      %s70 = ssub.s32 %s31, %s38
      %s71 = sor.u32 %s69, %s70
      %p72 = scmp.eq.s32.totalorder %s71, 0
      %s74 = sadd.s32 %s73, 1
      %s75 = scalar_select %p72, %s73, %s74
      %p78 = pneg %p72
      %p79 = scmp.eq.s32.totalorder %s23, 3
      %p80 = por %p78, %p79
      %p81 = scmp.ne.s32.totalorder %s73, %s76
      %p82 = scmp.eq.s32.totalorder %s23, 0
      %p83 = por %p81, %p82
      %p84 = scmp.ne.s32.totalorder %s73, %s76
      %p85 = scmp.eq.s32.totalorder %s28, 3
      %p86 = por %p84, %p85
      %p87 = scmp.ne.s32.totalorder %s76, %s77
      %p88 = scmp.eq.s32.totalorder %s28, 0
      %p89 = por %p87, %p88
      %p90 = scmp.ne.s32.totalorder %s76, %s77
      %p91 = scmp.eq.s32.totalorder %s29, 3
      %p92 = por %p90, %p91
      %p94 = scmp.ne.s32.totalorder %s77, %s93
      %p95 = scmp.eq.s32.totalorder %s29, 0
      %p96 = por %p94, %p95
      %p97 = scmp.le.s32.totalorder 1, %s23
      %p98 = scmp.lt.s32.totalorder %s23, 5
      %p99 = pnand %p97, %p98
      %p100 = pneg %p99
      // Predicated region
      $region9: #{tpu_custom_call.1} parent=5 // pred_check
        _
      $region10: #{tpu_custom_call.1} parent=5 // pred_check_branch
        %102 = sbr.rel (%p99) target = $region12
      $region11: #{tpu_custom_call.1} parent=5 // pred_region
        %s103 = ssub.s32 %s23, 1
      $region12: #{tpu_custom_call.1} parent=5 // pred_fallthru
        _
      %p104 = scmp.lt.s32.totalorder %s23, 4
      // Predicated region
      $region13: #{tpu_custom_call.1} parent=5 // pred_check
        %p105 = pneg %p104
      $region14: #{tpu_custom_call.1} parent=5 // pred_check_branch
        %107 = sbr.rel (%p105) target = $region16
      $region15: #{tpu_custom_call.1} parent=5 // pred_region
        // Predicated region
        $region17: #{tpu_custom_call.1} parent=15 // pred_check
          %p108 = pneg %p55
        $region18: #{tpu_custom_call.1} parent=15 // pred_check_branch
          %110 = sbr.rel (%p108) target = $region20
        $region19: #{tpu_custom_call.1} parent=15 // pred_region
          %s111 = sand.u32 %s45, 1
          %s112 = scalar_lea.sflag [#allocation8], %s111
          %s113 = sand.u32 %s45, 1
          %s114 = smul.addr %s113, 8
          %s115 = scalar_lea.vmem [#allocation7], %s114
          %s117 = ssub.s32 128, 128
          %118 = vsyncadd %s112, %s117
          %s119 = smul.addr %s31, 128
          %s120 = scalar_lea.hbm %s3, %s119
          %s122 = sshll.u32 %s115, 4
          %s123 = int_to_ptr.vmem [resolvable:$true] %s122
          %125 = dma.hbm_to_vmem [thread:$0]  %s120, 128, %s123, %s112
        $region20: #{tpu_custom_call.1} parent=15 // pred_fallthru
          _
      $region16: #{tpu_custom_call.1} parent=5 // pred_fallthru
        _
      %p126 = scmp.le.s32.totalorder 1, %s23
      %p127 = scmp.lt.s32.totalorder %s23, 5
      %p128 = pnand %p126, %p127
      %p129 = pneg %p128
      // Predicated region
      $region21: #{tpu_custom_call.1} parent=5 // pred_check
        _
      $region22: #{tpu_custom_call.1} parent=5 // pred_check_branch
        %131 = sbr.rel (%p128) target = $region24
      $region23: #{tpu_custom_call.1} parent=5 // pred_region
        %s132 = ssub.s32 %s23, 1
        %s133 = sand.u32 %s48, 1
        %s134 = scalar_lea.sflag [#allocation8], %s133
        %s135 = sand.u32 %s48, 1
        %s136 = smul.addr %s135, 8
        %s137 = scalar_lea.vmem [#allocation7], %s136
        // Predicated region
        $region25: #{tpu_custom_call.1} parent=23 // pred_check
          %p138 = pneg %p61
        $region26: #{tpu_custom_call.1} parent=23 // pred_check_branch
          %140 = sbr.rel (%p138) target = $region28
        $region27: #{tpu_custom_call.1} parent=23 // pred_region
          %141 = dma.done %s134, 128
        $region28: #{tpu_custom_call.1} parent=23 // pred_fallthru
          _
        %s142 = sand.u32 %s48, 1
        %s143 = scalar_lea.sflag [#allocation8], %s142
        %s144 = sand.u32 %s48, 1
        %s145 = smul.addr %s144, 8
        %s146 = scalar_lea.vmem [#allocation7], %s145
        %p147 = pneg %p61
        %p148 = pneg %p58
        %p149 = pneg %p89
        %p150 = pneg %p86
        %s151 = sand.u32 %s76, 1
        %s152 = scalar_lea.sflag [#allocation9], %s151
        %s153 = sand.u32 %s76, 1
        %s154 = smul.addr %s153, 8
        %s155 = scalar_lea.vmem [#allocation10], %s154
        %s156 = smul.u32 %s33, 8
        %s157 = sshra.s32 %s156, 7
        %s158 = sand.u32 %s156, 127
        %s159 = sadd.s32 %s157, %s32
        %s160 = smul.u32 %s159, 128
        %s161 = sshra.s32 %s156, 7
        %s162 = sand.u32 %s156, 127
        %s163 = sadd.s32 %s160, %s162
        %s164 = sld [smem:[#allocation6 + %s163]]
        %p165 = scmp.gt.s32.totalorder %s164, 0
        %s166 = scalar_select %p165, %s164, 0
        %p167 = scmp.lt.s32.totalorder %s166, 63
        %s168 = scalar_select %p167, %s166, 63
        %s169 = smul.addr %s168, 16
        %s170 = scalar_lea.hbm %s2, %s169
        // Predicated region
        $region29: #{tpu_custom_call.1} parent=23 // pred_check
          _
        $region30: #{tpu_custom_call.1} parent=23 // pred_check_branch
          %172 = sbr.rel target = $region32
        $region31: #{tpu_custom_call.1} parent=23 // pred_region
          %173 = sst [smem:[#allocation13]] [#allocation12]
          %174 = sst [smem:[#allocation14]] [#allocation11]
        $region32: #{tpu_custom_call.1} parent=23 // pred_fallthru
          _
        %176 = shalt.err (0)
        %s178 = sshll.u32 [#allocation2], 4
        %s179 = int_to_ptr.vmem [resolvable:$true] %s178
        %181 = dma.hbm_to_vmem [thread:$0]  %s170, 16, %s179, [#allocation3]
        %s182 = sadd.s32 %s156, 1
        %s183 = sshra.s32 %s182, 7
        %s184 = sand.u32 %s182, 127
        %s185 = sadd.s32 %s183, %s32
        %s186 = smul.u32 %s185, 128
        %s187 = sshra.s32 %s182, 7
        %s188 = sand.u32 %s182, 127
        %s189 = sadd.s32 %s186, %s188
        %s190 = sld [smem:[#allocation6 + %s189]]
        %p191 = scmp.gt.s32.totalorder %s190, 0
        %s192 = scalar_select %p191, %s190, 0
        %p193 = scmp.lt.s32.totalorder %s192, 63
        %s194 = scalar_select %p193, %s192, 63
        %s195 = smul.addr %s194, 16
        %s196 = scalar_lea.hbm %s2, %s195
        %s197 = scalar_lea.vmem [#allocation2], 1
        %s198 = scalar_lea.sflag [#allocation3], 1
        // Predicated region
        $region33: #{tpu_custom_call.1} parent=23 // pred_check
          _
        $region34: #{tpu_custom_call.1} parent=23 // pred_check_branch
          %200 = sbr.rel target = $region36
        $region35: #{tpu_custom_call.1} parent=23 // pred_region
          %201 = sst [smem:[#allocation13]] [#allocation16]
          %202 = sst [smem:[#allocation14]] [#allocation15]
        $region36: #{tpu_custom_call.1} parent=23 // pred_fallthru
          _
        %204 = shalt.err (0)
        %s206 = sshll.u32 %s197, 4
        %s207 = int_to_ptr.vmem [resolvable:$true] %s206
        %209 = dma.hbm_to_vmem [thread:$0]  %s196, 16, %s207, %s198
        %s210 = sadd.s32 %s156, 2
        %s211 = sshra.s32 %s210, 7
        %s212 = sand.u32 %s210, 127
        %s213 = sadd.s32 %s211, %s32
        %s214 = smul.u32 %s213, 128
        %s215 = sshra.s32 %s210, 7
        %s216 = sand.u32 %s210, 127
        %s217 = sadd.s32 %s214, %s216
        %s218 = sld [smem:[#allocation6 + %s217]]
        %p219 = scmp.gt.s32.totalorder %s218, 0
        %s220 = scalar_select %p219, %s218, 0
        %p221 = scmp.lt.s32.totalorder %s220, 63
        %s222 = scalar_select %p221, %s220, 63
        %s223 = smul.addr %s222, 16
        %s224 = scalar_lea.hbm %s2, %s223
        %s225 = scalar_lea.vmem [#allocation2], 2
        %s226 = scalar_lea.sflag [#allocation3], 2
        // Predicated region
        $region37: #{tpu_custom_call.1} parent=23 // pred_check
          _
        $region38: #{tpu_custom_call.1} parent=23 // pred_check_branch
          %228 = sbr.rel target = $region40
        $region39: #{tpu_custom_call.1} parent=23 // pred_region
          %229 = sst [smem:[#allocation13]] [#allocation18]
          %230 = sst [smem:[#allocation14]] [#allocation17]
        $region40: #{tpu_custom_call.1} parent=23 // pred_fallthru
          _
        %232 = shalt.err (0)
        %s234 = sshll.u32 %s225, 4
        %s235 = int_to_ptr.vmem [resolvable:$true] %s234
        %237 = dma.hbm_to_vmem [thread:$0]  %s224, 16, %s235, %s226
        %s238 = sadd.s32 %s156, 3
        %s239 = sshra.s32 %s238, 7
        %s240 = sand.u32 %s238, 127
        %s241 = sadd.s32 %s239, %s32
        %s242 = smul.u32 %s241, 128
        %s243 = sshra.s32 %s238, 7
        %s244 = sand.u32 %s238, 127
        %s245 = sadd.s32 %s242, %s244
        %s246 = sld [smem:[#allocation6 + %s245]]
        %p247 = scmp.gt.s32.totalorder %s246, 0
        %s248 = scalar_select %p247, %s246, 0
        %p249 = scmp.lt.s32.totalorder %s248, 63
        %s250 = scalar_select %p249, %s248, 63
        %s251 = smul.addr %s250, 16
        %s252 = scalar_lea.hbm %s2, %s251
        %s253 = scalar_lea.vmem [#allocation2], 3
        %s254 = scalar_lea.sflag [#allocation3], 3
        // Predicated region
        $region41: #{tpu_custom_call.1} parent=23 // pred_check
          _
        $region42: #{tpu_custom_call.1} parent=23 // pred_check_branch
          %256 = sbr.rel target = $region44
        $region43: #{tpu_custom_call.1} parent=23 // pred_region
          %257 = sst [smem:[#allocation13]] [#allocation20]
          %258 = sst [smem:[#allocation14]] [#allocation19]
        $region44: #{tpu_custom_call.1} parent=23 // pred_fallthru
          _
        %260 = shalt.err (0)
        %s262 = sshll.u32 %s253, 4
        %s263 = int_to_ptr.vmem [resolvable:$true] %s262
        %265 = dma.hbm_to_vmem [thread:$0]  %s252, 16, %s263, %s254
        %s266 = sadd.s32 %s156, 4
        %s267 = sshra.s32 %s266, 7
        %s268 = sand.u32 %s266, 127
        %s269 = sadd.s32 %s267, %s32
        %s270 = smul.u32 %s269, 128
        %s271 = sshra.s32 %s266, 7
        %s272 = sand.u32 %s266, 127
        %s273 = sadd.s32 %s270, %s272
        %s274 = sld [smem:[#allocation6 + %s273]]
        %p275 = scmp.gt.s32.totalorder %s274, 0
        %s276 = scalar_select %p275, %s274, 0
        %p277 = scmp.lt.s32.totalorder %s276, 63
        %s278 = scalar_select %p277, %s276, 63
        %s279 = smul.addr %s278, 16
        %s280 = scalar_lea.hbm %s2, %s279
        %s281 = scalar_lea.vmem [#allocation2], 4
        %s282 = scalar_lea.sflag [#allocation3], 4
        // Predicated region
        $region45: #{tpu_custom_call.1} parent=23 // pred_check
          _
        $region46: #{tpu_custom_call.1} parent=23 // pred_check_branch
          %284 = sbr.rel target = $region48
        $region47: #{tpu_custom_call.1} parent=23 // pred_region
          %285 = sst [smem:[#allocation13]] [#allocation22]
          %286 = sst [smem:[#allocation14]] [#allocation21]
        $region48: #{tpu_custom_call.1} parent=23 // pred_fallthru
          _
        %288 = shalt.err (0)
        %s290 = sshll.u32 %s281, 4
        %s291 = int_to_ptr.vmem [resolvable:$true] %s290
        %293 = dma.hbm_to_vmem [thread:$0]  %s280, 16, %s291, %s282
        %s294 = sadd.s32 %s156, 5
        %s295 = sshra.s32 %s294, 7
        %s296 = sand.u32 %s294, 127
        %s297 = sadd.s32 %s295, %s32
        %s298 = smul.u32 %s297, 128
        %s299 = sshra.s32 %s294, 7
        %s300 = sand.u32 %s294, 127
        %s301 = sadd.s32 %s298, %s300
        %s302 = sld [smem:[#allocation6 + %s301]]
        %p303 = scmp.gt.s32.totalorder %s302, 0
        %s304 = scalar_select %p303, %s302, 0
        %p305 = scmp.lt.s32.totalorder %s304, 63
        %s306 = scalar_select %p305, %s304, 63
        %s307 = smul.addr %s306, 16
        %s308 = scalar_lea.hbm %s2, %s307
        %s309 = scalar_lea.vmem [#allocation2], 5
        %s310 = scalar_lea.sflag [#allocation3], 5
        // Predicated region
        $region49: #{tpu_custom_call.1} parent=23 // pred_check
          _
        $region50: #{tpu_custom_call.1} parent=23 // pred_check_branch
          %312 = sbr.rel target = $region52
        $region51: #{tpu_custom_call.1} parent=23 // pred_region
          %313 = sst [smem:[#allocation13]] [#allocation24]
          %314 = sst [smem:[#allocation14]] [#allocation23]
        $region52: #{tpu_custom_call.1} parent=23 // pred_fallthru
          _
        %316 = shalt.err (0)
        %s318 = sshll.u32 %s309, 4
        %s319 = int_to_ptr.vmem [resolvable:$true] %s318
        %321 = dma.hbm_to_vmem [thread:$0]  %s308, 16, %s319, %s310
        %s322 = sadd.s32 %s156, 6
        %s323 = sshra.s32 %s322, 7
        %s324 = sand.u32 %s322, 127
        %s325 = sadd.s32 %s323, %s32
        %s326 = smul.u32 %s325, 128
        %s327 = sshra.s32 %s322, 7
        %s328 = sand.u32 %s322, 127
        %s329 = sadd.s32 %s326, %s328
        %s330 = sld [smem:[#allocation6 + %s329]]
        %p331 = scmp.gt.s32.totalorder %s330, 0
        %s332 = scalar_select %p331, %s330, 0
        %p333 = scmp.lt.s32.totalorder %s332, 63
        %s334 = scalar_select %p333, %s332, 63
        %s335 = smul.addr %s334, 16
        %s336 = scalar_lea.hbm %s2, %s335
        %s337 = scalar_lea.vmem [#allocation2], 6
        %s338 = scalar_lea.sflag [#allocation3], 6
        // Predicated region
        $region53: #{tpu_custom_call.1} parent=23 // pred_check
          _
        $region54: #{tpu_custom_call.1} parent=23 // pred_check_branch
          %340 = sbr.rel target = $region56
        $region55: #{tpu_custom_call.1} parent=23 // pred_region
          %341 = sst [smem:[#allocation13]] [#allocation26]
          %342 = sst [smem:[#allocation14]] [#allocation25]
        $region56: #{tpu_custom_call.1} parent=23 // pred_fallthru
          _
        %344 = shalt.err (0)
        %s346 = sshll.u32 %s337, 4
        %s347 = int_to_ptr.vmem [resolvable:$true] %s346
        %349 = dma.hbm_to_vmem [thread:$0]  %s336, 16, %s347, %s338
        %s350 = sadd.s32 %s156, 7
        %s351 = sshra.s32 %s350, 7
        %s352 = sand.u32 %s350, 127
        %s353 = sadd.s32 %s351, %s32
        %s354 = smul.u32 %s353, 128
        %s355 = sshra.s32 %s350, 7
        %s356 = sand.u32 %s350, 127
        %s357 = sadd.s32 %s354, %s356
        %s358 = sld [smem:[#allocation6 + %s357]]
        %p359 = scmp.gt.s32.totalorder %s358, 0
        %s360 = scalar_select %p359, %s358, 0
        %p361 = scmp.lt.s32.totalorder %s360, 63
        %s362 = scalar_select %p361, %s360, 63
        %s363 = smul.addr %s362, 16
        %s364 = scalar_lea.hbm %s2, %s363
        %s365 = scalar_lea.vmem [#allocation2], 7
        %s366 = scalar_lea.sflag [#allocation3], 7
        // Predicated region
        $region57: #{tpu_custom_call.1} parent=23 // pred_check
          _
        $region58: #{tpu_custom_call.1} parent=23 // pred_check_branch
          %368 = sbr.rel target = $region60
        $region59: #{tpu_custom_call.1} parent=23 // pred_region
          %369 = sst [smem:[#allocation13]] [#allocation28]
          %370 = sst [smem:[#allocation14]] [#allocation27]
        $region60: #{tpu_custom_call.1} parent=23 // pred_fallthru
          _
        %372 = shalt.err (0)
        %s374 = sshll.u32 %s365, 4
        %s375 = int_to_ptr.vmem [resolvable:$true] %s374
        %377 = dma.hbm_to_vmem [thread:$0]  %s364, 16, %s375, %s366
        %s378 = smul.u32 1, 1
        %s379 = sshll.u32 %s378, 4
        %380 = dma.done [#allocation3], %s379
        %s381 = sshll.u32 %s378, 4
        %382 = dma.done %s198, %s381
        %s383 = sshll.u32 %s378, 4
        %384 = dma.done %s226, %s383
        %s385 = sshll.u32 %s378, 4
        %386 = dma.done %s254, %s385
        %s387 = sshll.u32 %s378, 4
        %388 = dma.done %s282, %s387
        %s389 = sshll.u32 %s378, 4
        %390 = dma.done %s310, %s389
        %s391 = sshll.u32 %s378, 4
        %392 = dma.done %s338, %s391
        %s393 = sshll.u32 %s378, 4
        %394 = dma.done %s366, %s393
        %v395 = vld [vmem:[#allocation2] sm:$0xff]
        %v396 = vld [vmem:[%s137] sm:$0xff]
        %v397 = vadd.f32 %v395, %v396
        %398 = vst [vmem:[%s155] sm:$0xff] %v397
        %s399 = sand.u32 %s76, 1
        %s400 = scalar_lea.sflag [#allocation9], %s399
        %s401 = sand.u32 %s76, 1
        %s402 = smul.addr %s401, 8
        %s403 = scalar_lea.vmem [#allocation10], %s402
        // Predicated region
        $region61: #{tpu_custom_call.1} parent=23 // pred_check
          %p404 = pneg %p86
        $region62: #{tpu_custom_call.1} parent=23 // pred_check_branch
          %406 = sbr.rel (%p404) target = $region64
        $region63: #{tpu_custom_call.1} parent=23 // pred_region
          %s408 = ssub.s32 128, 128
          %409 = vsyncadd %s400, %s408
          %s410 = smul.addr %s32, 2
          %s411 = sadd.s32 %s33, %s410
          %s412 = smul.addr %s411, 128
          %s413 = scalar_lea.hbm %s4, %s412
          %s415 = sshll.u32 %s403, 4
          %s416 = int_to_ptr.vmem [resolvable:$true] %s415
          %418 = dma.vmem_to_hbm [thread:$0]  %s416, 128, %s413, %s400
        $region64: #{tpu_custom_call.1} parent=23 // pred_fallthru
          _
      $region24: #{tpu_custom_call.1} parent=5 // pred_fallthru
        _
      %p419 = scmp.le.s32.totalorder 2, %s23
      // Predicated region
      $region65: #{tpu_custom_call.1} parent=5 // pred_check
        %p420 = pneg %p419
      $region66: #{tpu_custom_call.1} parent=5 // pred_check_branch
        %422 = sbr.rel (%p420) target = $region68
      $region67: #{tpu_custom_call.1} parent=5 // pred_region
        %s423 = ssub.s32 %s23, 2
        // Predicated region
        $region69: #{tpu_custom_call.1} parent=67 // pred_check
          %p424 = pneg %p92
        $region70: #{tpu_custom_call.1} parent=67 // pred_check_branch
          %426 = sbr.rel (%p424) target = $region72
        $region71: #{tpu_custom_call.1} parent=67 // pred_region
          %s427 = sand.u32 %s77, 1
          %s428 = scalar_lea.sflag [#allocation9], %s427
          %s429 = sand.u32 %s77, 1
          %s430 = smul.addr %s429, 8
          %s431 = scalar_lea.vmem [#allocation10], %s430
          %432 = dma.done %s428, 128
        $region72: #{tpu_custom_call.1} parent=67 // pred_fallthru
          _
      $region68: #{tpu_custom_call.1} parent=5 // pred_fallthru
        _
    $region6: #{tpu_custom_call.1} parent=1 // loop_footer
      %s27 = sadd.s32 1, %s23
    $region7: #{tpu_custom_call.1} parent=1 // loop_footer_branch
      %22 = sbr.rel target = $region3
    $region8: #{tpu_custom_call.1} parent=1 // loop_exit
      _
    %433 = vsyncpa [#allocation8], 1
    %s434 = scalar_lea.sflag [#allocation8], 1
    %435 = vsyncpa %s434, 1
    %436 = vsyncpa [#allocation9], 1
    %s437 = scalar_lea.sflag [#allocation9], 1
    %438 = vsyncpa %s437, 1
  %439 = vsyncmov [#allocation3]
  %s440 = vpop.sfrf %439
  %p441 = scmp.eq.s32.totalorder %s440, 0
  %p442 = pneg %p441
  %444 = shalt.err (%p442)
  %s445 = scalar_lea.sflag [#allocation3], 1
  %446 = vsyncmov %s445
  %s447 = vpop.sfrf %446
  %p448 = scmp.eq.s32.totalorder %s447, 0
  %p449 = pneg %p448
  %451 = shalt.err (%p449)
  %s452 = scalar_lea.sflag [#allocation3], 2
  %453 = vsyncmov %s452
  %s454 = vpop.sfrf %453
  %p455 = scmp.eq.s32.totalorder %s454, 0
  %p456 = pneg %p455
  %458 = shalt.err (%p456)
  %s459 = scalar_lea.sflag [#allocation3], 3
  %460 = vsyncmov %s459
  %s461 = vpop.sfrf %460
  %p462 = scmp.eq.s32.totalorder %s461, 0
  %p463 = pneg %p462
  %465 = shalt.err (%p463)
  %s466 = scalar_lea.sflag [#allocation3], 4
  %467 = vsyncmov %s466
  %s468 = vpop.sfrf %467
  %p469 = scmp.eq.s32.totalorder %s468, 0
  %p470 = pneg %p469
  %472 = shalt.err (%p470)
  %s473 = scalar_lea.sflag [#allocation3], 5
  %474 = vsyncmov %s473
  %s475 = vpop.sfrf %474
  %p476 = scmp.eq.s32.totalorder %s475, 0
  %p477 = pneg %p476
  %479 = shalt.err (%p477)
  %s480 = scalar_lea.sflag [#allocation3], 6
  %481 = vsyncmov %s480
  %s482 = vpop.sfrf %481
  %p483 = scmp.eq.s32.totalorder %s482, 0
  %p484 = pneg %p483
  %486 = shalt.err (%p484)
  %s487 = scalar_lea.sflag [#allocation3], 7
  %488 = vsyncmov %s487
  %s489 = vpop.sfrf %488
  %p490 = scmp.eq.s32.totalorder %s489, 0
  %p491 = pneg %p490
  %493 = shalt.err (%p491)

</llo_original>
